<compile_context>
chip_gen: v5e
topology: v5e:2x2
jax: 0.10.0
libtpu: 0.0.40
codegen_flags: <defaults>
</compile_context>

<pallas_src>
import functools

import numpy as np

import jax
import jax.numpy as jnp
from jax.experimental import pallas as pl
from jax.experimental.pallas import tpu as pltpu

_EPS = 1e-5


# ---------------------------------------------------------------------------
# Fused kernel: the whole basic block for one image, entirely in VMEM.
# ---------------------------------------------------------------------------

def _block_kernel(x_ref, w1s_ref, w1c_ref, w2_ref, w3_ref, b_ref, out_ref,
                  pad_in, pad_mid, *, H, W, Cin, Cout):
    """BasicBlockRN12 forward for one image (lane-dense layout).

    x_ref   : (1, H, W*Cin)            bf16   input rows, lane-dense
    w1s_ref : (2, W*Cin, W*Cout)       bf16   conv1 banded RHS, ky=0 and ky=2
    w1c_ref : (W*Cin, 2*W*Cout)        bf16   [conv1 ky=1 | 1x1 shortcut]
    w2_ref  : (3, W*Cout, W*Cout)      bf16   conv2 banded RHS per ky
    w3_ref  : (3, W*Cout, W*Cout)      bf16   conv3 banded RHS per ky
    b_ref   : (4, W*Cout)              f32    tiled BN biases [b1, b2, b3, bs]
    out_ref : (1, H, W*Cout)           f32    lane-dense output slab
    pad_in  : VMEM (H+2, W*Cin)  bf16  height-padded input
    pad_mid : VMEM (H+2, W*Cout) bf16  height-padded intermediate
    """
    Li = W * Cin
    Lo = W * Cout
    f32 = jnp.float32

    def lrelu(v):                                  # negative_slope = 0.1
        return jnp.where(v >= 0, v, 0.1 * v)

    # ---- height-pad the input (width padding is baked into the weights) ---
    # Zero the border as 2-row pairs (aligned with bf16 sublane packing);
    # row 1 / row H are immediately overwritten by the interior store.
    zrow_i = jnp.zeros((2, Li), pad_in.dtype)
    pad_in[0:2, :] = zrow_i
    pad_in[H:H + 2, :] = zrow_i
    pad_in[1:H + 1, :] = x_ref[0]

    # ---- conv1 (+ merged 1x1 shortcut) + bn1 + leaky_relu ------------------
    # out = sum_ky pad[ky:ky+H, :] @ A_ky ; center tap shares its LHS with the
    # shortcut, so its RHS carries both and we split columns at lane 128.
    yc = jnp.dot(pad_in[1:H + 1, :], w1c_ref[...],
                 preferred_element_type=f32)                     # (H, 2*Lo)
    y = (jnp.dot(pad_in[0:H, :], w1s_ref[0], preferred_element_type=f32)
         + yc[:, :Lo]
         + jnp.dot(pad_in[2:H + 2, :], w1s_ref[1], preferred_element_type=f32))
    short = yc[:, Lo:] + b_ref[3:4, :]                           # (H, Lo) f32
    y = lrelu(y + b_ref[0:1, :])                                 # (H, Lo) f32

    zrow_o = jnp.zeros((2, Lo), pad_mid.dtype)
    pad_mid[0:2, :] = zrow_o
    pad_mid[H:H + 2, :] = zrow_o
    pad_mid[1:H + 1, :] = y.astype(pad_mid.dtype)

    # ---- conv2 + bn2 + leaky_relu ------------------------------------------
    y = (jnp.dot(pad_mid[0:H, :], w2_ref[0], preferred_element_type=f32)
         + jnp.dot(pad_mid[1:H + 1, :], w2_ref[1], preferred_element_type=f32)
         + jnp.dot(pad_mid[2:H + 2, :], w2_ref[2], preferred_element_type=f32))
    y = lrelu(y + b_ref[1:2, :])
    pad_mid[1:H + 1, :] = y.astype(pad_mid.dtype)   # border stays zero

    # ---- conv3 + bn3 + residual add (no activation in this block) ----------
    y = (jnp.dot(pad_mid[0:H, :], w3_ref[0], preferred_element_type=f32)
         + jnp.dot(pad_mid[1:H + 1, :], w3_ref[1], preferred_element_type=f32)
         + jnp.dot(pad_mid[2:H + 2, :], w3_ref[2], preferred_element_type=f32))
    out_ref[0] = y + b_ref[2:3, :] + short          # full-width, aligned vst


# ---------------------------------------------------------------------------
# Wrapper: one pallas_call for the whole block, one grid step per image.
# ---------------------------------------------------------------------------

def basic_block_rn12(x_nchw, kp, planes):
    """Forward pass of BasicBlockRN12. Input NCHW -> output NCHW (float32)."""
    x = jnp.transpose(x_nchw, (0, 2, 3, 1)).astype(jnp.bfloat16)   # NHWC bf16
    N, H, W, Cin = x.shape
    Cout = planes
    Li, Lo = W * Cin, W * Cout
    x = x.reshape(N, H, Li)          # free: merge last two axes (row-major)

    kern = functools.partial(_block_kernel, H=H, W=W, Cin=Cin, Cout=Cout)
    out = pl.pallas_call(
        kern,
        out_shape=jax.ShapeDtypeStruct((N, H, Lo), jnp.float32),
        grid=(N,),
        in_specs=[
            pl.BlockSpec((1, H, Li), lambda n: (n, 0, 0)),      # x (per image)
            pl.BlockSpec((2, Li, Lo), lambda n: (0, 0, 0)),     # w1 side taps
            pl.BlockSpec((Li, 2 * Lo), lambda n: (0, 0)),       # w1 center | shortcut
            pl.BlockSpec((3, Lo, Lo), lambda n: (0, 0, 0)),     # w2
            pl.BlockSpec((3, Lo, Lo), lambda n: (0, 0, 0)),     # w3
            pl.BlockSpec((4, Lo), lambda n: (0, 0)),            # tiled biases
        ],
        out_specs=pl.BlockSpec((1, H, Lo), lambda n: (n, 0, 0)),
        scratch_shapes=[
            pltpu.VMEM((H + 2, Li), jnp.bfloat16),               # padded input
            pltpu.VMEM((H + 2, Lo), jnp.bfloat16),               # padded mid
        ],
        compiler_params=pltpu.CompilerParams(
            dimension_semantics=("parallel",)),   # 1 image per TC on v7x
    )(x, kp["w1s"], kp["w1c"], kp["w2"], kp["w3"], kp["bias"])

    out = out.reshape(N, H, W, Cout)     # free: row-major layout unchanged
    return jnp.transpose(out, (0, 3, 1, 2))


# ---------------------------------------------------------------------------
# Parameter init (BN folded) + host-side packing into banded matmul operands.
# ---------------------------------------------------------------------------

def init_params(key, in_planes, planes):
    """Dense folded weights (bf16, HWIO) + folded BN biases (f32)."""
    ks = jax.random.split(key, 8)

    def bn(k, c):
        k0, k1, k2, k3 = jax.random.split(k, 4)
        gamma = jax.random.normal(k0, (c,), jnp.float32) * 0.1 + 1.0
        beta = jax.random.normal(k1, (c,), jnp.float32) * 0.1
        mean = jax.random.normal(k2, (c,), jnp.float32) * 0.1
        var = jax.random.uniform(k3, (c,), jnp.float32, 0.5, 1.5)
        scale = gamma / jnp.sqrt(var + _EPS)
        bias = beta - mean * scale
        return scale, bias

    w1 = jax.random.normal(ks[0], (3, 3, in_planes, planes), jnp.float32) * 0.1
    w2 = jax.random.normal(ks[1], (3, 3, planes, planes), jnp.float32) * 0.1
    w3 = jax.random.normal(ks[2], (3, 3, planes, planes), jnp.float32) * 0.1
    ws = jax.random.normal(ks[3], (in_planes, planes), jnp.float32) * 0.1
    s1, b1 = bn(ks[4], planes)
    s2, b2 = bn(ks[5], planes)
    s3, b3 = bn(ks[6], planes)
    ss, bs = bn(ks[7], planes)

    return {
        "w1": (w1 * s1).astype(jnp.bfloat16),
        "w2": (w2 * s2).astype(jnp.bfloat16),
        "w3": (w3 * s3).astype(jnp.bfloat16),
        "ws": (ws * ss).astype(jnp.bfloat16),
        "b1": b1, "b2": b2, "b3": b3, "bs": bs,
    }


def _banded_3x3(w_hwio, W):
    """Dense (3,3,Ci,Co) kernel -> per-ky banded RHS over lane-dense rows.

    A[ky, wi*Ci + ci, w*Co + co] = w[ky, kx, ci, co] with wi = w + kx - 1;
    taps falling outside [0, W) are dropped, which implements the zero
    width-padding of the conv.
    """
    _, _, Ci, Co = w_hwio.shape
    A = np.zeros((3, W * Ci, W * Co), np.float32)
    for ky in range(3):
        for kx in range(3):
            for w in range(W):
                wi = w + kx - 1
                if 0 <= wi < W:
                    A[ky, wi * Ci:(wi + 1) * Ci, w * Co:(w + 1) * Co] = \
                        w_hwio[ky, kx]
    return A


def _banded_1x1(w_io, W):
    Ci, Co = w_io.shape
    A = np.zeros((W * Ci, W * Co), np.float32)
    for w in range(W):
        A[w * Ci:(w + 1) * Ci, w * Co:(w + 1) * Co] = w_io
    return A


def prepare_kernel_params(p, W):
    """One-time host-side packing of folded weights into kernel operands."""
    w1 = np.asarray(p["w1"].astype(jnp.float32))
    w2 = np.asarray(p["w2"].astype(jnp.float32))
    w3 = np.asarray(p["w3"].astype(jnp.float32))
    ws = np.asarray(p["ws"].astype(jnp.float32))

    A1 = _banded_3x3(w1, W)
    A2 = _banded_3x3(w2, W)
    A3 = _banded_3x3(w3, W)
    As = _banded_1x1(ws, W)

    bias = np.stack([np.tile(np.asarray(p[k]), W)
                     for k in ("b1", "b2", "b3", "bs")]).astype(np.float32)

    return {
        "w1s": jnp.asarray(np.stack([A1[0], A1[2]]), jnp.bfloat16),
        "w1c": jnp.asarray(np.concatenate([A1[1], As], axis=-1), jnp.bfloat16),
        "w2": jnp.asarray(A2, jnp.bfloat16),
        "w3": jnp.asarray(A3, jnp.bfloat16),
        "bias": jnp.asarray(bias, jnp.float32),
    }


# ---------------------------------------------------------------------------
# Pure-JAX reference (same bf16 cast points, f32 accumulation).
# ---------------------------------------------------------------------------

def _ref_forward(x_nchw, p):
    x = jnp.transpose(x_nchw, (0, 2, 3, 1)).astype(jnp.bfloat16)
    Cin, Cout = p["ws"].shape

    def conv3x3(v, w):
        return jax.lax.conv_general_dilated(
            v, w, (1, 1), [(1, 1), (1, 1)],
            dimension_numbers=("NHWC", "HWIO", "NHWC"),
            preferred_element_type=jnp.float32)

    def lrelu(v):
        return jnp.where(v >= 0, v, 0.1 * v)

    y = lrelu(conv3x3(x, p["w1"]) + p["b1"]).astype(jnp.bfloat16)
    y = lrelu(conv3x3(y, p["w2"]) + p["b2"]).astype(jnp.bfloat16)
    y3 = conv3x3(y, p["w3"]) + p["b3"]
    short = jax.lax.conv_general_dilated(
        x, p["ws"].reshape(1, 1, Cin, Cout), (1, 1), "VALID",
        dimension_numbers=("NHWC", "HWIO", "NHWC"),
        preferred_element_type=jnp.float32) + p["bs"]
    out = y3 + short
    return jnp.transpose(out, (0, 3, 1, 2))


# ---------------------------------------------------------------------------
# Main
# ---------------------------------------------------------------------------

if __name__ == "__main__":
    key = jax.random.PRNGKey(0)
    k_x, k_p = jax.random.split(key)

    N, in_planes, planes, H, W = 2, 4, 8, 16, 16
    x = jax.random.normal(k_x, (N, in_planes, H, W), jnp.float32)

    params = init_params(k_p, in_planes, planes)
    kparams = prepare_kernel_params(params, W)

    out = jax.block_until_ready(basic_block_rn12(x, kparams, planes))
    ref = jax.block_until_ready(_ref_forward(x, params))

    assert out.shape == (N, planes, H, W), out.shape
    # Identical bf16 operands / f32 accumulation on both sides; tolerance
    # covers accumulation-order + intermediate bf16 rounding differences.
    err = float(jnp.max(jnp.abs(out - ref)))
    assert err < 2e-2, err

    print("KERNEL_OK")
</pallas_src>

<mosaic_0001>
module attributes {stable_mosaic.version = 11 : i64} {
  func.func @_block_kernel(%arg0: i32, %arg1: memref<1x16x64xbf16, #tpu.memory_space<vmem>>, %arg2: memref<2x64x128xbf16, #tpu.memory_space<vmem>>, %arg3: memref<64x256xbf16, #tpu.memory_space<vmem>>, %arg4: memref<3x128x128xbf16, #tpu.memory_space<vmem>>, %arg5: memref<3x128x128xbf16, #tpu.memory_space<vmem>>, %arg6: memref<4x128xf32, #tpu.memory_space<vmem>>, %arg7: memref<1x16x128xf32, #tpu.memory_space<vmem>>, %arg8: memref<18x64xbf16, #tpu.memory_space<vmem>>, %arg9: memref<18x128xbf16, #tpu.memory_space<vmem>>) attributes {dimension_semantics = [#tpu.dimension_semantics<parallel>], iteration_bounds = array<i64: 2>, scalar_prefetch = 0 : i64, scratch_operands = 2 : i64, tpu.core_type = #tpu.core_type<tc>, window_params = [{transform_indices = @transform_0, window_bounds = array<i64: 1, 16, 64>}, {pipeline_mode = #tpu.pipeline_mode<synchronous>, transform_indices = @transform_1, window_bounds = array<i64: 2, 64, 128>}, {pipeline_mode = #tpu.pipeline_mode<synchronous>, transform_indices = @transform_2, window_bounds = array<i64: 64, 256>}, {pipeline_mode = #tpu.pipeline_mode<synchronous>, transform_indices = @transform_3, window_bounds = array<i64: 3, 128, 128>}, {pipeline_mode = #tpu.pipeline_mode<synchronous>, transform_indices = @transform_4, window_bounds = array<i64: 3, 128, 128>}, {pipeline_mode = #tpu.pipeline_mode<synchronous>, transform_indices = @transform_5, window_bounds = array<i64: 4, 128>}, {transform_indices = @transform_6, window_bounds = array<i64: 1, 16, 128>}]} {
    %cst = arith.constant 0.000000e+00 : bf16
    %0 = vector.broadcast %cst : bf16 to vector<2x64xbf16>
    %c0 = arith.constant 0 : index
    %c0_0 = arith.constant 0 : index
    %1 = vector.load %arg8[%c0, %c0_0] : memref<18x64xbf16, #tpu.memory_space<vmem>>, vector<2x64xbf16>
    tpu.vector_store %arg8[%c0, %c0_0], %0 {strides = array<i32>} : memref<18x64xbf16, #tpu.memory_space<vmem>>, vector<2x64xbf16>,
    %c16 = arith.constant 16 : index
    %c0_1 = arith.constant 0 : index
    %2 = vector.load %arg8[%c16, %c0_1] : memref<18x64xbf16, #tpu.memory_space<vmem>>, vector<2x64xbf16>
    tpu.vector_store %arg8[%c16, %c0_1], %0 {strides = array<i32>} : memref<18x64xbf16, #tpu.memory_space<vmem>>, vector<2x64xbf16>,
    %c0_2 = arith.constant 0 : index
    %c0_3 = arith.constant 0 : index
    %c0_4 = arith.constant 0 : index
    %3 = vector.load %arg1[%c0_2, %c0_3, %c0_4] : memref<1x16x64xbf16, #tpu.memory_space<vmem>>, vector<1x16x64xbf16>
    %4 = vector.shape_cast %3 : vector<1x16x64xbf16> to vector<16x64xbf16>
    %c1 = arith.constant 1 : index
    %c0_5 = arith.constant 0 : index
    %5 = vector.load %arg8[%c1, %c0_5] : memref<18x64xbf16, #tpu.memory_space<vmem>>, vector<16x64xbf16>
    tpu.vector_store %arg8[%c1, %c0_5], %4 {strides = array<i32>} : memref<18x64xbf16, #tpu.memory_space<vmem>>, vector<16x64xbf16>,
    %c1_6 = arith.constant 1 : index
    %c0_7 = arith.constant 0 : index
    %6 = vector.load %arg8[%c1_6, %c0_7] : memref<18x64xbf16, #tpu.memory_space<vmem>>, vector<16x64xbf16>
    %c0_8 = arith.constant 0 : index
    %c0_9 = arith.constant 0 : index
    %7 = vector.load %arg3[%c0_8, %c0_9] : memref<64x256xbf16, #tpu.memory_space<vmem>>, vector<64x256xbf16>
    %cst_10 = arith.constant dense<0.000000e+00> : vector<16x256xf32>
    %8 = tpu.matmul %6, %7, %cst_10 {dimension_numbers = #tpu.dot_dimension_numbers<[1], [0], [0], [1], [0, 0, 1, 1], [], []>} : vector<16x64xbf16>, vector<64x256xbf16>, vector<16x256xf32> -> vector<16x256xf32>
    %c0_11 = arith.constant 0 : index
    %c0_12 = arith.constant 0 : index
    %9 = vector.load %arg8[%c0_11, %c0_12] : memref<18x64xbf16, #tpu.memory_space<vmem>>, vector<16x64xbf16>
    %c0_13 = arith.constant 0 : index
    %c0_14 = arith.constant 0 : index
    %c0_15 = arith.constant 0 : index
    %10 = vector.load %arg2[%c0_13, %c0_14, %c0_15] : memref<2x64x128xbf16, #tpu.memory_space<vmem>>, vector<1x64x128xbf16>
    %11 = vector.shape_cast %10 : vector<1x64x128xbf16> to vector<64x128xbf16>
    %cst_16 = arith.constant dense<0.000000e+00> : vector<16x128xf32>
    %12 = tpu.matmul %9, %11, %cst_16 {dimension_numbers = #tpu.dot_dimension_numbers<[1], [0], [0], [1], [0, 0, 1, 1], [], []>} : vector<16x64xbf16>, vector<64x128xbf16>, vector<16x128xf32> -> vector<16x128xf32>
    %13 = vector.extract_strided_slice %8 {offsets = [0, 0], sizes = [16, 128], strides = [1, 1]} : vector<16x256xf32> to vector<16x128xf32>
    %14 = arith.addf %12, %13 : vector<16x128xf32>
    %c2 = arith.constant 2 : index
    %c0_17 = arith.constant 0 : index
    %15 = vector.load %arg8[%c2, %c0_17] : memref<18x64xbf16, #tpu.memory_space<vmem>>, vector<16x64xbf16>
    %c1_18 = arith.constant 1 : index
    %c0_19 = arith.constant 0 : index
    %c0_20 = arith.constant 0 : index
    %16 = vector.load %arg2[%c1_18, %c0_19, %c0_20] : memref<2x64x128xbf16, #tpu.memory_space<vmem>>, vector<1x64x128xbf16>
    %17 = vector.shape_cast %16 : vector<1x64x128xbf16> to vector<64x128xbf16>
    %cst_21 = arith.constant dense<0.000000e+00> : vector<16x128xf32>
    %18 = tpu.matmul %15, %17, %cst_21 {dimension_numbers = #tpu.dot_dimension_numbers<[1], [0], [0], [1], [0, 0, 1, 1], [], []>} : vector<16x64xbf16>, vector<64x128xbf16>, vector<16x128xf32> -> vector<16x128xf32>
    %19 = arith.addf %14, %18 : vector<16x128xf32>
    %20 = vector.extract_strided_slice %8 {offsets = [0, 128], sizes = [16, 128], strides = [1, 1]} : vector<16x256xf32> to vector<16x128xf32>
    %c3 = arith.constant 3 : index
    %c0_22 = arith.constant 0 : index
    %21 = vector.load %arg6[%c3, %c0_22] : memref<4x128xf32, #tpu.memory_space<vmem>>, vector<1x128xf32>
    %22 = vector.broadcast %21 : vector<1x128xf32> to vector<16x128xf32>
    %23 = arith.addf %20, %22 : vector<16x128xf32>
    %c0_23 = arith.constant 0 : index
    %c0_24 = arith.constant 0 : index
    %24 = vector.load %arg6[%c0_23, %c0_24] : memref<4x128xf32, #tpu.memory_space<vmem>>, vector<1x128xf32>
    %25 = vector.broadcast %24 : vector<1x128xf32> to vector<16x128xf32>
    %26 = arith.addf %19, %25 : vector<16x128xf32>
    %cst_25 = arith.constant 0.000000e+00 : f32
    %27 = vector.broadcast %cst_25 : f32 to vector<16x128xf32>
    %28 = arith.cmpf oge, %26, %27 : vector<16x128xf32>
    %cst_26 = arith.constant 1.000000e-01 : f32
    %29 = vector.broadcast %cst_26 : f32 to vector<16x128xf32>
    %30 = arith.mulf %29, %26 : vector<16x128xf32>
    %31 = arith.select %28, %26, %30 : vector<16x128xi1>, vector<16x128xf32>
    %cst_27 = arith.constant 0.000000e+00 : bf16
    %32 = vector.broadcast %cst_27 : bf16 to vector<2x128xbf16>
    %c0_28 = arith.constant 0 : index
    %c0_29 = arith.constant 0 : index
    %33 = vector.load %arg9[%c0_28, %c0_29] : memref<18x128xbf16, #tpu.memory_space<vmem>>, vector<2x128xbf16>
    tpu.vector_store %arg9[%c0_28, %c0_29], %32 {strides = array<i32>} : memref<18x128xbf16, #tpu.memory_space<vmem>>, vector<2x128xbf16>,
    %c16_30 = arith.constant 16 : index
    %c0_31 = arith.constant 0 : index
    %34 = vector.load %arg9[%c16_30, %c0_31] : memref<18x128xbf16, #tpu.memory_space<vmem>>, vector<2x128xbf16>
    tpu.vector_store %arg9[%c16_30, %c0_31], %32 {strides = array<i32>} : memref<18x128xbf16, #tpu.memory_space<vmem>>, vector<2x128xbf16>,
    %35 = arith.truncf %31 : vector<16x128xf32> to vector<16x128xbf16>
    %c1_32 = arith.constant 1 : index
    %c0_33 = arith.constant 0 : index
    %36 = vector.load %arg9[%c1_32, %c0_33] : memref<18x128xbf16, #tpu.memory_space<vmem>>, vector<16x128xbf16>
    tpu.vector_store %arg9[%c1_32, %c0_33], %35 {strides = array<i32>} : memref<18x128xbf16, #tpu.memory_space<vmem>>, vector<16x128xbf16>,
    %c0_34 = arith.constant 0 : index
    %c0_35 = arith.constant 0 : index
    %37 = vector.load %arg9[%c0_34, %c0_35] : memref<18x128xbf16, #tpu.memory_space<vmem>>, vector<16x128xbf16>
    %c0_36 = arith.constant 0 : index
    %c0_37 = arith.constant 0 : index
    %c0_38 = arith.constant 0 : index
    %38 = vector.load %arg4[%c0_36, %c0_37, %c0_38] : memref<3x128x128xbf16, #tpu.memory_space<vmem>>, vector<1x128x128xbf16>
    %39 = vector.shape_cast %38 : vector<1x128x128xbf16> to vector<128x128xbf16>
    %cst_39 = arith.constant dense<0.000000e+00> : vector<16x128xf32>
    %40 = tpu.matmul %37, %39, %cst_39 {dimension_numbers = #tpu.dot_dimension_numbers<[1], [0], [0], [1], [0, 0, 1, 1], [], []>} : vector<16x128xbf16>, vector<128x128xbf16>, vector<16x128xf32> -> vector<16x128xf32>
    %c1_40 = arith.constant 1 : index
    %c0_41 = arith.constant 0 : index
    %41 = vector.load %arg9[%c1_40, %c0_41] : memref<18x128xbf16, #tpu.memory_space<vmem>>, vector<16x128xbf16>
    %c1_42 = arith.constant 1 : index
    %c0_43 = arith.constant 0 : index
    %c0_44 = arith.constant 0 : index
    %42 = vector.load %arg4[%c1_42, %c0_43, %c0_44] : memref<3x128x128xbf16, #tpu.memory_space<vmem>>, vector<1x128x128xbf16>
    %43 = vector.shape_cast %42 : vector<1x128x128xbf16> to vector<128x128xbf16>
    %cst_45 = arith.constant dense<0.000000e+00> : vector<16x128xf32>
    %44 = tpu.matmul %41, %43, %cst_45 {dimension_numbers = #tpu.dot_dimension_numbers<[1], [0], [0], [1], [0, 0, 1, 1], [], []>} : vector<16x128xbf16>, vector<128x128xbf16>, vector<16x128xf32> -> vector<16x128xf32>
    %45 = arith.addf %40, %44 : vector<16x128xf32>
    %c2_46 = arith.constant 2 : index
    %c0_47 = arith.constant 0 : index
    %46 = vector.load %arg9[%c2_46, %c0_47] : memref<18x128xbf16, #tpu.memory_space<vmem>>, vector<16x128xbf16>
    %c2_48 = arith.constant 2 : index
    %c0_49 = arith.constant 0 : index
    %c0_50 = arith.constant 0 : index
    %47 = vector.load %arg4[%c2_48, %c0_49, %c0_50] : memref<3x128x128xbf16, #tpu.memory_space<vmem>>, vector<1x128x128xbf16>
    %48 = vector.shape_cast %47 : vector<1x128x128xbf16> to vector<128x128xbf16>
    %cst_51 = arith.constant dense<0.000000e+00> : vector<16x128xf32>
    %49 = tpu.matmul %46, %48, %cst_51 {dimension_numbers = #tpu.dot_dimension_numbers<[1], [0], [0], [1], [0, 0, 1, 1], [], []>} : vector<16x128xbf16>, vector<128x128xbf16>, vector<16x128xf32> -> vector<16x128xf32>
    %50 = arith.addf %45, %49 : vector<16x128xf32>
    %c1_52 = arith.constant 1 : index
    %c0_53 = arith.constant 0 : index
    %51 = vector.load %arg6[%c1_52, %c0_53] : memref<4x128xf32, #tpu.memory_space<vmem>>, vector<1x128xf32>
    %52 = vector.broadcast %51 : vector<1x128xf32> to vector<16x128xf32>
    %53 = arith.addf %50, %52 : vector<16x128xf32>
    %cst_54 = arith.constant 0.000000e+00 : f32
    %54 = vector.broadcast %cst_54 : f32 to vector<16x128xf32>
    %55 = arith.cmpf oge, %53, %54 : vector<16x128xf32>
    %cst_55 = arith.constant 1.000000e-01 : f32
    %56 = vector.broadcast %cst_55 : f32 to vector<16x128xf32>
    %57 = arith.mulf %56, %53 : vector<16x128xf32>
    %58 = arith.select %55, %53, %57 : vector<16x128xi1>, vector<16x128xf32>
    %59 = arith.truncf %58 : vector<16x128xf32> to vector<16x128xbf16>
    %c1_56 = arith.constant 1 : index
    %c0_57 = arith.constant 0 : index
    %60 = vector.load %arg9[%c1_56, %c0_57] : memref<18x128xbf16, #tpu.memory_space<vmem>>, vector<16x128xbf16>
    tpu.vector_store %arg9[%c1_56, %c0_57], %59 {strides = array<i32>} : memref<18x128xbf16, #tpu.memory_space<vmem>>, vector<16x128xbf16>,
    %c0_58 = arith.constant 0 : index
    %c0_59 = arith.constant 0 : index
    %61 = vector.load %arg9[%c0_58, %c0_59] : memref<18x128xbf16, #tpu.memory_space<vmem>>, vector<16x128xbf16>
    %c0_60 = arith.constant 0 : index
    %c0_61 = arith.constant 0 : index
    %c0_62 = arith.constant 0 : index
    %62 = vector.load %arg5[%c0_60, %c0_61, %c0_62] : memref<3x128x128xbf16, #tpu.memory_space<vmem>>, vector<1x128x128xbf16>
    %63 = vector.shape_cast %62 : vector<1x128x128xbf16> to vector<128x128xbf16>
    %cst_63 = arith.constant dense<0.000000e+00> : vector<16x128xf32>
    %64 = tpu.matmul %61, %63, %cst_63 {dimension_numbers = #tpu.dot_dimension_numbers<[1], [0], [0], [1], [0, 0, 1, 1], [], []>} : vector<16x128xbf16>, vector<128x128xbf16>, vector<16x128xf32> -> vector<16x128xf32>
    %c1_64 = arith.constant 1 : index
    %c0_65 = arith.constant 0 : index
    %65 = vector.load %arg9[%c1_64, %c0_65] : memref<18x128xbf16, #tpu.memory_space<vmem>>, vector<16x128xbf16>
    %c1_66 = arith.constant 1 : index
    %c0_67 = arith.constant 0 : index
    %c0_68 = arith.constant 0 : index
    %66 = vector.load %arg5[%c1_66, %c0_67, %c0_68] : memref<3x128x128xbf16, #tpu.memory_space<vmem>>, vector<1x128x128xbf16>
    %67 = vector.shape_cast %66 : vector<1x128x128xbf16> to vector<128x128xbf16>
    %cst_69 = arith.constant dense<0.000000e+00> : vector<16x128xf32>
    %68 = tpu.matmul %65, %67, %cst_69 {dimension_numbers = #tpu.dot_dimension_numbers<[1], [0], [0], [1], [0, 0, 1, 1], [], []>} : vector<16x128xbf16>, vector<128x128xbf16>, vector<16x128xf32> -> vector<16x128xf32>
    %69 = arith.addf %64, %68 : vector<16x128xf32>
    %c2_70 = arith.constant 2 : index
    %c0_71 = arith.constant 0 : index
    %70 = vector.load %arg9[%c2_70, %c0_71] : memref<18x128xbf16, #tpu.memory_space<vmem>>, vector<16x128xbf16>
    %c2_72 = arith.constant 2 : index
    %c0_73 = arith.constant 0 : index
    %c0_74 = arith.constant 0 : index
    %71 = vector.load %arg5[%c2_72, %c0_73, %c0_74] : memref<3x128x128xbf16, #tpu.memory_space<vmem>>, vector<1x128x128xbf16>
    %72 = vector.shape_cast %71 : vector<1x128x128xbf16> to vector<128x128xbf16>
    %cst_75 = arith.constant dense<0.000000e+00> : vector<16x128xf32>
    %73 = tpu.matmul %70, %72, %cst_75 {dimension_numbers = #tpu.dot_dimension_numbers<[1], [0], [0], [1], [0, 0, 1, 1], [], []>} : vector<16x128xbf16>, vector<128x128xbf16>, vector<16x128xf32> -> vector<16x128xf32>
    %74 = arith.addf %69, %73 : vector<16x128xf32>
    %c2_76 = arith.constant 2 : index
    %c0_77 = arith.constant 0 : index
    %75 = vector.load %arg6[%c2_76, %c0_77] : memref<4x128xf32, #tpu.memory_space<vmem>>, vector<1x128xf32>
    %76 = vector.broadcast %75 : vector<1x128xf32> to vector<16x128xf32>
    %77 = arith.addf %74, %76 : vector<16x128xf32>
    %78 = arith.addf %77, %23 : vector<16x128xf32>
    %c0_78 = arith.constant 0 : index
    %c0_79 = arith.constant 0 : index
    %c0_80 = arith.constant 0 : index
    %79 = vector.load %arg7[%c0_78, %c0_79, %c0_80] : memref<1x16x128xf32, #tpu.memory_space<vmem>>, vector<1x16x128xf32>
    %80 = vector.shape_cast %79 : vector<1x16x128xf32> to vector<16x128xf32>
    %81 = vector.shape_cast %78 : vector<16x128xf32> to vector<1x16x128xf32>
    tpu.vector_store %arg7[%c0_78, %c0_79, %c0_80], %81 {strides = array<i32>} : memref<1x16x128xf32, #tpu.memory_space<vmem>>, vector<1x16x128xf32>,
    return
  }
  func.func @transform_0(%arg0: i32) -> (i32, i32, i32) {
    %c0_i32 = arith.constant 0 : i32
    %c0_i32_0 = arith.constant 0 : i32
    %c0_i32_1 = arith.constant 0 : i32
    return %arg0, %c0_i32, %c0_i32_0 : i32, i32, i32
  }
  func.func @transform_1(%arg0: i32) -> (i32, i32, i32) {
    %c0_i32 = arith.constant 0 : i32
    %c0_i32_0 = arith.constant 0 : i32
    %c0_i32_1 = arith.constant 0 : i32
    %c0_i32_2 = arith.constant 0 : i32
    return %c0_i32, %c0_i32_0, %c0_i32_1 : i32, i32, i32
  }
  func.func @transform_2(%arg0: i32) -> (i32, i32) {
    %c0_i32 = arith.constant 0 : i32
    %c0_i32_0 = arith.constant 0 : i32
    %c0_i32_1 = arith.constant 0 : i32
    return %c0_i32, %c0_i32_0 : i32, i32
  }
  func.func @transform_3(%arg0: i32) -> (i32, i32, i32) {
    %c0_i32 = arith.constant 0 : i32
    %c0_i32_0 = arith.constant 0 : i32
    %c0_i32_1 = arith.constant 0 : i32
    %c0_i32_2 = arith.constant 0 : i32
    return %c0_i32, %c0_i32_0, %c0_i32_1 : i32, i32, i32
  }
  func.func @transform_4(%arg0: i32) -> (i32, i32, i32) {
    %c0_i32 = arith.constant 0 : i32
    %c0_i32_0 = arith.constant 0 : i32
    %c0_i32_1 = arith.constant 0 : i32
    %c0_i32_2 = arith.constant 0 : i32
    return %c0_i32, %c0_i32_0, %c0_i32_1 : i32, i32, i32
  }
  func.func @transform_5(%arg0: i32) -> (i32, i32) {
    %c0_i32 = arith.constant 0 : i32
    %c0_i32_0 = arith.constant 0 : i32
    %c0_i32_1 = arith.constant 0 : i32
    return %c0_i32, %c0_i32_0 : i32, i32
  }
  func.func @transform_6(%arg0: i32) -> (i32, i32, i32) {
    %c0_i32 = arith.constant 0 : i32
    %c0_i32_0 = arith.constant 0 : i32
    %c0_i32_1 = arith.constant 0 : i32
    return %arg0, %c0_i32, %c0_i32_0 : i32, i32, i32
  }
}

</mosaic_0001>

<llo_original>
// kernel: tpu_custom_call.1
$region0: #{tpu_custom_call.1}
  #allocation0 [shape = 'u32[]', space=smem, size = 0x4, offset = 0x4, fixed_abs, tag = 'smem constant byte address 0x4 - core index']
  #allocation1 [shape = 'u32[72,128]{1,0:T(1,128)}', space=vmem, size = 0x9000, scoped, tag = 'internal scratch']
  #allocation2 [shape = 'bf16[18,64]{1,0:T(8,128)(2,1)}', space=vmem, size = 0x1800, scoped, tag = 'scratch operand']
  #allocation3 [shape = 'bf16[18,128]{1,0:T(8,128)(2,1)}', space=vmem, size = 0x1800, scoped, tag = 'scratch operand']
  %s0 = inlined_call_operand.hbm [shape: bf16[2,16,64], index: 0, kind: input, shape index: {}]
  %s1 = inlined_call_operand.hbm [shape: bf16[2,64,128], index: 1, kind: input, shape index: {}]
  %s2 = inlined_call_operand.hbm [shape: bf16[64,256], index: 2, kind: input, shape index: {}]
  %s3 = inlined_call_operand.hbm [shape: bf16[3,128,128], index: 3, kind: input, shape index: {}]
  %s4 = inlined_call_operand.hbm [shape: bf16[3,128,128], index: 4, kind: input, shape index: {}]
  %s5 = inlined_call_operand.vmem [shape: f32[4,128], index: 5, kind: input, shape index: {}]
  %s6 = inlined_call_operand.hbm [shape: f32[2,16,128], index: 6, kind: output, shape index: {}]
  %s7 = sld [smem:[#allocation0]]
  $region77: #{tpu_custom_call.1} parent=0
    _
  %s9 = ssub.s32 1, %s7
  %s10 = scalar_select 0, %s9, %s7
  $region1: #{tpu_custom_call.1} parent=0
    #allocation4 [shape = 'u8[8192]{0}', space=vmem, size = 0x2000, scoped, tag = 'input window, operand 0']
    #allocation5 [shape = 's32[2]{0}', space=sflag, size = 0x8, scoped, tag = 'scoped memory for tpu_custom_call.1']
    #allocation6 [shape = 's32[2]{0}', space=sflag, size = 0x8, scoped, tag = 'scoped memory for tpu_custom_call.1']
    #allocation7 [shape = 'u8[32768]{0}', space=vmem, size = 0x8000, scoped, tag = 'input window, operand 1, single buffered']
    #allocation8 [shape = 's32[1]{0}', space=sflag, size = 0x4, scoped, tag = 'scoped memory for tpu_custom_call.1']
    #allocation9 [shape = 'u8[32768]{0}', space=vmem, size = 0x8000, scoped, tag = 'input window, operand 2, single buffered']
    #allocation10 [shape = 'u8[98304]{0}', space=vmem, size = 0x18000, scoped, tag = 'input window, operand 3, single buffered']
    #allocation11 [shape = 's32[1]{0}', space=sflag, size = 0x4, scoped, tag = 'scoped memory for tpu_custom_call.1']
    #allocation12 [shape = 'u8[98304]{0}', space=vmem, size = 0x18000, scoped, tag = 'input window, operand 4, single buffered']
    #allocation13 [shape = 'u8[16384]{0}', space=vmem, size = 0x4000, scoped, tag = 'output window, operand 0']
    %11 = vsyncpa [#allocation5], 0
    %s12 = scalar_lea.sflag [#allocation5], 1
    %13 = vsyncpa %s12, 0
    %14 = vsyncpa [#allocation8], 0
    %15 = vsyncpa [#allocation11], 0
    %16 = vsyncpa [#allocation6], 0
    %s17 = scalar_lea.sflag [#allocation6], 1
    %18 = vsyncpa %s17, 0
    loop: start=0, step=1, limit=4
    $region2: #{tpu_custom_call.1} parent=1 // loop_pre_header
      _
    $region3: #{tpu_custom_call.1} parent=1 // loop_header
      %s20 = sphi 0, %s24
      %p21 = scmp.ge.s32.totalorder %s20, 4
      %s30 = sphi 0, %s32
      %s33 = sphi 0, %s30
      %s34 = sphi 0, %s33
      %s50 = sphi 0, %s34
      %s54 = sphi 0, %s54
      %s56 = sphi 0, %s54
      %s57 = sphi 0, %s56
      %s71 = sphi 0, %s57
      %s75 = sphi 0, %s75
      %s77 = sphi 0, %s75
      %s78 = sphi 0, %s77
      %s92 = sphi 0, %s78
      %s96 = sphi 0, %s96
      %s98 = sphi 0, %s96
      %s99 = sphi 0, %s98
      %s113 = sphi 0, %s99
      %s117 = sphi 0, %s117
      %s119 = sphi 0, %s117
      %s120 = sphi 0, %s119
      %s134 = sphi 0, %s120
      %s138 = sphi 0, %s138
      %s140 = sphi 0, %s138
      %s141 = sphi 0, %s140
      %s155 = sphi 0, %s141
      %s161 = sphi 0, %s163
      %s164 = sphi 0, %s161
      %s165 = sphi 0, %s164
      %s181 = sphi 0, %s165
    $region4: #{tpu_custom_call.1} parent=1 // loop_header_branch
      %23 = sbr.rel (%p21) target = $region8
    $region5: #{tpu_custom_call.1} parent=1 // loop_body
      %s25 = ssub.s32 %s20, 1
      %s26 = ssub.s32 %s20, 2
      %s27 = sadd.s32 %s20, 1
      %s28 = ssub.s32 %s20, %s27
      %p29 = scmp.eq.s32.totalorder %s28, 0
      %s31 = sadd.s32 %s30, 1
      %s32 = scalar_select %p29, %s30, %s31
      %p35 = pneg %p29
      %p36 = scmp.eq.s32.totalorder %s20, 1
      %p37 = por %p35, %p36
      %p38 = scmp.ne.s32.totalorder %s30, %s33
      %p39 = scmp.eq.s32.totalorder %s20, 0
      %p40 = por %p38, %p39
      %p41 = scmp.ne.s32.totalorder %s30, %s33
      %p42 = scmp.eq.s32.totalorder %s25, 1
      %p43 = por %p41, %p42
      %p44 = scmp.ne.s32.totalorder %s33, %s34
      %p45 = scmp.eq.s32.totalorder %s25, 0
      %p46 = por %p44, %p45
      %p47 = scmp.ne.s32.totalorder %s33, %s34
      %p48 = scmp.eq.s32.totalorder %s26, 1
      %p49 = por %p47, %p48
      %p51 = scmp.ne.s32.totalorder %s34, %s50
      %p52 = scmp.eq.s32.totalorder %s26, 0
      %p53 = por %p51, %p52
      %s55 = sadd.s32 %s54, 1
      %p58 = scmp.eq.s32.totalorder %s20, 1
      %p59 = scmp.ne.s32.totalorder %s54, %s56
      %p60 = scmp.eq.s32.totalorder %s20, 0
      %p61 = por %p59, %p60
      %p62 = scmp.ne.s32.totalorder %s54, %s56
      %p63 = scmp.eq.s32.totalorder %s25, 1
      %p64 = por %p62, %p63
      %p65 = scmp.ne.s32.totalorder %s56, %s57
      %p66 = scmp.eq.s32.totalorder %s25, 0
      %p67 = por %p65, %p66
      %p68 = scmp.ne.s32.totalorder %s56, %s57
      %p69 = scmp.eq.s32.totalorder %s26, 1
      %p70 = por %p68, %p69
      %p72 = scmp.ne.s32.totalorder %s57, %s71
      %p73 = scmp.eq.s32.totalorder %s26, 0
      %p74 = por %p72, %p73
      %s76 = sadd.s32 %s75, 1
      %p79 = scmp.eq.s32.totalorder %s20, 1
      %p80 = scmp.ne.s32.totalorder %s75, %s77
      %p81 = scmp.eq.s32.totalorder %s20, 0
      %p82 = por %p80, %p81
      %p83 = scmp.ne.s32.totalorder %s75, %s77
      %p84 = scmp.eq.s32.totalorder %s25, 1
      %p85 = por %p83, %p84
      %p86 = scmp.ne.s32.totalorder %s77, %s78
      %p87 = scmp.eq.s32.totalorder %s25, 0
      %p88 = por %p86, %p87
      %p89 = scmp.ne.s32.totalorder %s77, %s78
      %p90 = scmp.eq.s32.totalorder %s26, 1
      %p91 = por %p89, %p90
      %p93 = scmp.ne.s32.totalorder %s78, %s92
      %p94 = scmp.eq.s32.totalorder %s26, 0
      %p95 = por %p93, %p94
      %s97 = sadd.s32 %s96, 1
      %p100 = scmp.eq.s32.totalorder %s20, 1
      %p101 = scmp.ne.s32.totalorder %s96, %s98
      %p102 = scmp.eq.s32.totalorder %s20, 0
      %p103 = por %p101, %p102
      %p104 = scmp.ne.s32.totalorder %s96, %s98
      %p105 = scmp.eq.s32.totalorder %s25, 1
      %p106 = por %p104, %p105
      %p107 = scmp.ne.s32.totalorder %s98, %s99
      %p108 = scmp.eq.s32.totalorder %s25, 0
      %p109 = por %p107, %p108
      %p110 = scmp.ne.s32.totalorder %s98, %s99
      %p111 = scmp.eq.s32.totalorder %s26, 1
      %p112 = por %p110, %p111
      %p114 = scmp.ne.s32.totalorder %s99, %s113
      %p115 = scmp.eq.s32.totalorder %s26, 0
      %p116 = por %p114, %p115
      %s118 = sadd.s32 %s117, 1
      %p121 = scmp.eq.s32.totalorder %s20, 1
      %p122 = scmp.ne.s32.totalorder %s117, %s119
      %p123 = scmp.eq.s32.totalorder %s20, 0
      %p124 = por %p122, %p123
      %p125 = scmp.ne.s32.totalorder %s117, %s119
      %p126 = scmp.eq.s32.totalorder %s25, 1
      %p127 = por %p125, %p126
      %p128 = scmp.ne.s32.totalorder %s119, %s120
      %p129 = scmp.eq.s32.totalorder %s25, 0
      %p130 = por %p128, %p129
      %p131 = scmp.ne.s32.totalorder %s119, %s120
      %p132 = scmp.eq.s32.totalorder %s26, 1
      %p133 = por %p131, %p132
      %p135 = scmp.ne.s32.totalorder %s120, %s134
      %p136 = scmp.eq.s32.totalorder %s26, 0
      %p137 = por %p135, %p136
      %s139 = sadd.s32 %s138, 1
      %p142 = scmp.eq.s32.totalorder %s20, 1
      %p143 = scmp.ne.s32.totalorder %s138, %s140
      %p144 = scmp.eq.s32.totalorder %s20, 0
      %p145 = por %p143, %p144
      %p146 = scmp.ne.s32.totalorder %s138, %s140
      %p147 = scmp.eq.s32.totalorder %s25, 1
      %p148 = por %p146, %p147
      %p149 = scmp.ne.s32.totalorder %s140, %s141
      %p150 = scmp.eq.s32.totalorder %s25, 0
      %p151 = por %p149, %p150
      %p152 = scmp.ne.s32.totalorder %s140, %s141
      %p153 = scmp.eq.s32.totalorder %s26, 1
      %p154 = por %p152, %p153
      %p156 = scmp.ne.s32.totalorder %s141, %s155
      %p157 = scmp.eq.s32.totalorder %s26, 0
      %p158 = por %p156, %p157
      %s159 = ssub.s32 %s20, %s27
      %p160 = scmp.eq.s32.totalorder %s159, 0
      %s162 = sadd.s32 %s161, 1
      %s163 = scalar_select %p160, %s161, %s162
      %p166 = pneg %p160
      %p167 = scmp.eq.s32.totalorder %s20, 1
      %p168 = por %p166, %p167
      %p169 = scmp.ne.s32.totalorder %s161, %s164
      %p170 = scmp.eq.s32.totalorder %s20, 0
      %p171 = por %p169, %p170
      %p172 = scmp.ne.s32.totalorder %s161, %s164
      %p173 = scmp.eq.s32.totalorder %s25, 1
      %p174 = por %p172, %p173
      %p175 = scmp.ne.s32.totalorder %s164, %s165
      %p176 = scmp.eq.s32.totalorder %s25, 0
      %p177 = por %p175, %p176
      %p178 = scmp.ne.s32.totalorder %s164, %s165
      %p179 = scmp.eq.s32.totalorder %s26, 1
      %p180 = por %p178, %p179
      %p182 = scmp.ne.s32.totalorder %s165, %s181
      %p183 = scmp.eq.s32.totalorder %s26, 0
      %p184 = por %p182, %p183
      %p185 = scmp.le.s32.totalorder 1, %s20
      %p186 = scmp.lt.s32.totalorder %s20, 3
      %p187 = pnand %p185, %p186
      %p188 = pneg %p187
      // Predicated region
      $region9: #{tpu_custom_call.1} parent=5 // pred_check
        _
      $region10: #{tpu_custom_call.1} parent=5 // pred_check_branch
        %190 = sbr.rel (%p187) target = $region12
      $region11: #{tpu_custom_call.1} parent=5 // pred_region
        %s191 = ssub.s32 %s20, 1
        // Predicated region
        $region13: #{tpu_custom_call.1} parent=11 // pred_check
          %p192 = pneg %p67
        $region14: #{tpu_custom_call.1} parent=11 // pred_check_branch
          %194 = sbr.rel (%p192) target = $region16
        $region15: #{tpu_custom_call.1} parent=11 // pred_region
          %196 = vsyncadd [#allocation8], 0
          %s197 = sshll.u32 %s1, 4
          %s198 = int_to_ptr.hbm [resolvable:$true] %s197
          %s199 = sshll.u32 [#allocation7], 4
          %s200 = int_to_ptr.vmem [resolvable:$true] %s199
          %205 = dma.hbm_to_vmem [thread:$0]  %s198, 1024, %s200, [#allocation8], 64, 64, 4
        $region16: #{tpu_custom_call.1} parent=11 // pred_fallthru
          _
        // Predicated region
        $region17: #{tpu_custom_call.1} parent=11 // pred_check
          %p206 = pneg %p88
        $region18: #{tpu_custom_call.1} parent=11 // pred_check_branch
          %208 = sbr.rel (%p206) target = $region20
        $region19: #{tpu_custom_call.1} parent=11 // pred_region
          %210 = vsyncadd [#allocation8], 0
          %s211 = sshll.u32 %s2, 4
          %s212 = int_to_ptr.hbm [resolvable:$true] %s211
          %s213 = sshll.u32 [#allocation9], 4
          %s214 = int_to_ptr.vmem [resolvable:$true] %s213
          %219 = dma.hbm_to_vmem [thread:$0]  %s212, 1024, %s214, [#allocation8], 128, 128, 8
        $region20: #{tpu_custom_call.1} parent=11 // pred_fallthru
          _
        // Predicated region
        $region21: #{tpu_custom_call.1} parent=11 // pred_check
          %p220 = pneg %p109
        $region22: #{tpu_custom_call.1} parent=11 // pred_check_branch
          %222 = sbr.rel (%p220) target = $region24
        $region23: #{tpu_custom_call.1} parent=11 // pred_region
          %224 = vsyncadd [#allocation11], 0
          %s225 = sshll.u32 %s3, 4
          %s226 = int_to_ptr.hbm [resolvable:$true] %s225
          %s227 = sshll.u32 [#allocation10], 4
          %s228 = int_to_ptr.vmem [resolvable:$true] %s227
          %233 = dma.hbm_to_vmem [thread:$0]  %s226, 3072, %s228, [#allocation11], 64, 64, 4
        $region24: #{tpu_custom_call.1} parent=11 // pred_fallthru
          _
        // Predicated region
        $region25: #{tpu_custom_call.1} parent=11 // pred_check
          %p234 = pneg %p130
        $region26: #{tpu_custom_call.1} parent=11 // pred_check_branch
          %236 = sbr.rel (%p234) target = $region28
        $region27: #{tpu_custom_call.1} parent=11 // pred_region
          %238 = vsyncadd [#allocation11], 0
          %s239 = sshll.u32 %s4, 4
          %s240 = int_to_ptr.hbm [resolvable:$true] %s239
          %s241 = sshll.u32 [#allocation12], 4
          %s242 = int_to_ptr.vmem [resolvable:$true] %s241
          %247 = dma.hbm_to_vmem [thread:$0]  %s240, 3072, %s242, [#allocation11], 64, 64, 4
        $region28: #{tpu_custom_call.1} parent=11 // pred_fallthru
          _
        // Predicated region
        $region29: #{tpu_custom_call.1} parent=11 // pred_check
          %p248 = pneg %p151
        $region30: #{tpu_custom_call.1} parent=11 // pred_check_branch
          %250 = sbr.rel (%p248) target = $region32
        $region31: #{tpu_custom_call.1} parent=11 // pred_region
          _
        $region32: #{tpu_custom_call.1} parent=11 // pred_fallthru
          _
      $region12: #{tpu_custom_call.1} parent=5 // pred_fallthru
        _
      %p251 = scmp.lt.s32.totalorder %s20, 2
      // Predicated region
      $region33: #{tpu_custom_call.1} parent=5 // pred_check
        %p252 = pneg %p251
      $region34: #{tpu_custom_call.1} parent=5 // pred_check_branch
        %254 = sbr.rel (%p252) target = $region36
      $region35: #{tpu_custom_call.1} parent=5 // pred_region
        // Predicated region
        $region37: #{tpu_custom_call.1} parent=35 // pred_check
          %p255 = pneg %p40
        $region38: #{tpu_custom_call.1} parent=35 // pred_check_branch
          %257 = sbr.rel (%p255) target = $region40
        $region39: #{tpu_custom_call.1} parent=35 // pred_region
          %s258 = sand.u32 %s30, 1
          %s259 = scalar_lea.sflag [#allocation5], %s258
          %s260 = sand.u32 %s30, 1
          %s261 = smul.addr %s260, 8
          %s262 = scalar_lea.vmem [#allocation4], %s261
          %264 = vsyncadd %s259, 0
          %s265 = smul.addr %s20, 2
          %s266 = smul.addr %s265, 4
          %s267 = scalar_lea.hbm %s0, %s266
          %s268 = sshll.u32 %s267, 4
          %s269 = int_to_ptr.hbm [resolvable:$true] %s268
          %s270 = sshll.u32 %s262, 4
          %s271 = int_to_ptr.vmem [resolvable:$true] %s270
          %276 = dma.hbm_to_vmem [thread:$0]  %s269, 128, %s271, %s259, 64, 64, 4
        $region40: #{tpu_custom_call.1} parent=35 // pred_fallthru
          _
      $region36: #{tpu_custom_call.1} parent=5 // pred_fallthru
        _
      %p277 = scmp.le.s32.totalorder 1, %s20
      %p278 = scmp.lt.s32.totalorder %s20, 3
      %p279 = pnand %p277, %p278
      %p280 = pneg %p279
      // Predicated region
      $region41: #{tpu_custom_call.1} parent=5 // pred_check
        _
      $region42: #{tpu_custom_call.1} parent=5 // pred_check_branch
        %282 = sbr.rel (%p279) target = $region44
      $region43: #{tpu_custom_call.1} parent=5 // pred_region
        %s283 = ssub.s32 %s20, 1
        %s284 = sand.u32 %s33, 1
        %s285 = scalar_lea.sflag [#allocation5], %s284
        %s286 = sand.u32 %s33, 1
        %s287 = smul.addr %s286, 8
        %s288 = scalar_lea.vmem [#allocation4], %s287
        // Predicated region
        $region45: #{tpu_custom_call.1} parent=43 // pred_check
          %p289 = pneg %p46
        $region46: #{tpu_custom_call.1} parent=43 // pred_check_branch
          %291 = sbr.rel (%p289) target = $region48
        $region47: #{tpu_custom_call.1} parent=43 // pred_region
          %293 = dma.done %s285, 128
        $region48: #{tpu_custom_call.1} parent=43 // pred_fallthru
          _
        // Predicated region
        $region49: #{tpu_custom_call.1} parent=43 // pred_check
          %p294 = pneg %p67
        $region50: #{tpu_custom_call.1} parent=43 // pred_check_branch
          %296 = sbr.rel (%p294) target = $region52
        $region51: #{tpu_custom_call.1} parent=43 // pred_region
          %298 = dma.done [#allocation8], 1024
        $region52: #{tpu_custom_call.1} parent=43 // pred_fallthru
          _
        // Predicated region
        $region53: #{tpu_custom_call.1} parent=43 // pred_check
          %p299 = pneg %p88
        $region54: #{tpu_custom_call.1} parent=43 // pred_check_branch
          %301 = sbr.rel (%p299) target = $region56
        $region55: #{tpu_custom_call.1} parent=43 // pred_region
          %303 = dma.done [#allocation8], 1024
        $region56: #{tpu_custom_call.1} parent=43 // pred_fallthru
          _
        // Predicated region
        $region57: #{tpu_custom_call.1} parent=43 // pred_check
          %p304 = pneg %p109
        $region58: #{tpu_custom_call.1} parent=43 // pred_check_branch
          %306 = sbr.rel (%p304) target = $region60
        $region59: #{tpu_custom_call.1} parent=43 // pred_region
          %308 = dma.done [#allocation11], 3072
        $region60: #{tpu_custom_call.1} parent=43 // pred_fallthru
          _
        // Predicated region
        $region61: #{tpu_custom_call.1} parent=43 // pred_check
          %p309 = pneg %p130
        $region62: #{tpu_custom_call.1} parent=43 // pred_check_branch
          %311 = sbr.rel (%p309) target = $region64
        $region63: #{tpu_custom_call.1} parent=43 // pred_region
          %313 = dma.done [#allocation11], 3072
        $region64: #{tpu_custom_call.1} parent=43 // pred_fallthru
          _
        %s314 = sand.u32 %s33, 1
        %s315 = scalar_lea.sflag [#allocation5], %s314
        %s316 = sand.u32 %s33, 1
        %s317 = smul.addr %s316, 8
        %s318 = scalar_lea.vmem [#allocation4], %s317
        %p319 = pneg %p46
        %p320 = pneg %p43
        %p321 = pneg %p67
        %p322 = pneg %p64
        %p323 = pneg %p88
        %p324 = pneg %p85
        %p325 = pneg %p109
        %p326 = pneg %p106
        %p327 = pneg %p130
        %p328 = pneg %p127
        %p329 = pneg %p151
        %p330 = pneg %p148
        %p331 = pneg %p177
        %p332 = pneg %p174
        %s333 = sand.u32 %s164, 1
        %s334 = scalar_lea.sflag [#allocation6], %s333
        %s335 = sand.u32 %s164, 1
        %s336 = smul.addr %s335, 16
        %s337 = scalar_lea.vmem [#allocation13], %s336
        %vm339 = vcmask 516096
        %340 = vst.msk [vmem:[#allocation2] sm:$0x1] %vm339, 0
        %341 = vst.msk [vmem:[#allocation2 + $0x8] sm:$0x1] %vm339, 0
        %v342 = vld [vmem:[%s288] sm:$0xf]
        %v343 = vld [vmem:[%s288 + $0x4] sm:$0xf]
        %vm344 = vsmask.f32 256
        %vm345 = vsmask.f32 4368
        %vm346 = vmor %vm344, %vm345
        %v348 = vshrl.u32 %v342, 16
        %v350 = vrot.slane %v348, 7
        %v351 = vshll.u32 %v342, 16
        %v353 = vor.u32 %v350, %v351
        %v354 = vrot.slane %v350, 4
        %v356 = vshrl.u32 %v343, 16
        %v358 = vrot.slane %v356, 7
        %v359 = vshll.u32 %v343, 16
        %v361 = vor.u32 %v358, %v359
        %v362 = vsel %vm346, %v354, %v361
        %v363 = vrot.slane %v358, 4
        %vm367 = vcmask 519168
        %vm368 = vsmask.f32 7938
        %vm369 = vmand %vm367, %vm368
        %v370 = vld [vmem:[#allocation2] sm:$0xf]
        %v371 = vsel %vm369, %v353, %v370
        %372 = vst [vmem:[#allocation2] sm:$0xf] %v371
        %vm373 = vcmask 519168
        %374 = vst.msk [vmem:[#allocation2 + $0x4] sm:$0xf] %vm373, %v362
        %vm375 = vcmask 516096
        %vm376 = vmand %vm375, %vm344
        %v377 = vld [vmem:[#allocation2 + $0x8] sm:$0x1]
        %v378 = vsel %vm376, %v363, %v377
        %379 = vst [vmem:[#allocation2 + $0x8] sm:$0x1] %v378
        %v380 = vld [vmem:[#allocation2] sm:$0xf]
        %v381 = vld [vmem:[#allocation2 + $0x4] sm:$0xf]
        %v382 = vld [vmem:[#allocation2 + $0x8] sm:$0x1]
        %v383 = vld [vmem:[#allocation9] sm:$0xff]
        %v384 = vld [vmem:[#allocation9 + $0x8] sm:$0xff]
        %v385 = vld [vmem:[#allocation9 + $0x10] sm:$0xff]
        %v386 = vld [vmem:[#allocation9 + $0x18] sm:$0xff]
        %v387 = vld [vmem:[#allocation9 + $0x20] sm:$0xff]
        %v388 = vld [vmem:[#allocation9 + $0x28] sm:$0xff]
        %v389 = vld [vmem:[#allocation9 + $0x30] sm:$0xff]
        %v390 = vld [vmem:[#allocation9 + $0x38] sm:$0xff]
        %v394 = vunpack.c.l.b16 %v380
        %v395 = vunpack.c.l.b16 %v381
        %v396 = vunpack.c.l.b16 %v382
        %v397 = vpack.c.b16 %v395, %v394
        %v398 = vpack.c.b16 %v396, %v396
        %vm399 = vsmask.f32 7424
        %v401 = vshrl.u32 %v397, 16
        %v403 = vshll.u32 %v397, 16
        %v405 = vrot.slane %v403, 1
        %v406 = vor.u32 %v401, %v405
        %v408 = vshll.u32 %v398, 16
        %v410 = vrot.slane %v408, 1
        %v411 = vsel %vm399, %v406, %v410
        %v420 = vunpack.c.l.b16 %v383
        %v421 = vunpack.c.h.b16 %v383
        %v422 = vunpack.c.l.b16 %v384
        %v423 = vunpack.c.h.b16 %v384
        %v424 = vunpack.c.l.b16 %v385
        %v425 = vunpack.c.h.b16 %v385
        %v426 = vunpack.c.l.b16 %v386
        %v427 = vunpack.c.h.b16 %v386
        %v428 = vunpack.c.l.b16 %v387
        %v429 = vunpack.c.h.b16 %v387
        %v430 = vunpack.c.l.b16 %v388
        %v431 = vunpack.c.h.b16 %v388
        %v432 = vunpack.c.l.b16 %v389
        %v433 = vunpack.c.h.b16 %v389
        %v434 = vunpack.c.l.b16 %v390
        %v435 = vunpack.c.h.b16 %v390
        %v436 = vpack.c.b16 %v422, %v420
        %v437 = vpack.c.b16 %v423, %v421
        %v438 = vpack.c.b16 %v426, %v424
        %v439 = vpack.c.b16 %v427, %v425
        %v440 = vpack.c.b16 %v430, %v428
        %v441 = vpack.c.b16 %v431, %v429
        %v442 = vpack.c.b16 %v434, %v432
        %v443 = vpack.c.b16 %v435, %v433
        %vm452 = vcmask 523264
        %v454 = vsel %vm452, %v411, 0
        %456 = vmatpush.bf16.msra.mxu0 0
        %457 = vmatpush.bf16.msra.mxu0 0
        %458 = vmatpush.bf16.msra.mxu0 0
        %459 = vmatpush.bf16.msra.mxu0 0
        %460 = vmatpush.bf16.msra.mxu0 %v442
        %461 = vmatpush.bf16.msra.mxu0 %v440
        %462 = vmatpush.bf16.msra.mxu0 %v438
        %463 = vmatpush.bf16.msra.mxu0 %v436
        %464 = vmatmul.bf16.gmra.mxu0 %v454
        %v465 = vpop.f32.mrf.mxu0
        %v466 = vadd.f32 0.0, %v465
        %v467 = vpop.f32.mrf.mxu0
        %v468 = vadd.f32 0.0, %v467
        %469 = vdwg.mxu0
        %470 = vmatpush.bf16.msra.mxu0 0
        %471 = vmatpush.bf16.msra.mxu0 0
        %472 = vmatpush.bf16.msra.mxu0 0
        %473 = vmatpush.bf16.msra.mxu0 0
        %474 = vmatpush.bf16.msra.mxu0 %v443
        %475 = vmatpush.bf16.msra.mxu0 %v441
        %476 = vmatpush.bf16.msra.mxu0 %v439
        %477 = vmatpush.bf16.msra.mxu0 %v437
        %478 = vmatmul.bf16.gmra.mxu0 %v454
        %v479 = vpop.f32.mrf.mxu0
        %v480 = vadd.f32 0.0, %v479
        %v481 = vpop.f32.mrf.mxu0
        %v482 = vadd.f32 0.0, %v481
        %483 = vdwg.mxu0
        %v484 = vld [vmem:[#allocation2] sm:$0xf]
        %v485 = vld [vmem:[#allocation2 + $0x4] sm:$0xf]
        %v486 = vld [vmem:[#allocation7] sm:$0xf]
        %v487 = vld [vmem:[#allocation7 + $0x4] sm:$0xf]
        %v488 = vld [vmem:[#allocation7 + $0x8] sm:$0xf]
        %v489 = vld [vmem:[#allocation7 + $0xc] sm:$0xf]
        %v490 = vld [vmem:[#allocation7 + $0x10] sm:$0xf]
        %v491 = vld [vmem:[#allocation7 + $0x14] sm:$0xf]
        %v492 = vld [vmem:[#allocation7 + $0x18] sm:$0xf]
        %v493 = vld [vmem:[#allocation7 + $0x1c] sm:$0xf]
        %v496 = vunpack.c.l.b16 %v484
        %v497 = vunpack.c.l.b16 %v485
        %v498 = vpack.c.b16 %v497, %v496
        %v507 = vunpack.c.l.b16 %v486
        %v508 = vunpack.c.l.b16 %v487
        %v509 = vunpack.c.l.b16 %v488
        %v510 = vunpack.c.l.b16 %v489
        %v511 = vunpack.c.l.b16 %v490
        %v512 = vunpack.c.l.b16 %v491
        %v513 = vunpack.c.l.b16 %v492
        %v514 = vunpack.c.l.b16 %v493
        %v515 = vpack.c.b16 %v508, %v507
        %v516 = vpack.c.b16 %v510, %v509
        %v517 = vpack.c.b16 %v512, %v511
        %v518 = vpack.c.b16 %v514, %v513
        %v524 = vsel %vm452, %v498, 0
        %526 = vmatpush.bf16.msra.mxu0 0
        %527 = vmatpush.bf16.msra.mxu0 0
        %528 = vmatpush.bf16.msra.mxu0 0
        %529 = vmatpush.bf16.msra.mxu0 0
        %530 = vmatpush.bf16.msra.mxu0 %v518
        %531 = vmatpush.bf16.msra.mxu0 %v517
        %532 = vmatpush.bf16.msra.mxu0 %v516
        %533 = vmatpush.bf16.msra.mxu0 %v515
        %534 = vmatmul.bf16.gmra.mxu0 %v524
        %v535 = vpop.f32.mrf.mxu0
        %v536 = vadd.f32 %v466, %v535
        %v537 = vpop.f32.mrf.mxu0
        %v538 = vadd.f32 %v468, %v537
        %539 = vdwg.mxu0
        %v540 = vld [vmem:[#allocation2] sm:$0xe]
        %s541 = scalar_lea.vmem [#allocation7], 32
        %v542 = vld [vmem:[%s541] sm:$0xf]
        %v543 = vld [vmem:[%s541 + $0x4] sm:$0xf]
        %v544 = vld [vmem:[%s541 + $0x8] sm:$0xf]
        %v545 = vld [vmem:[%s541 + $0xc] sm:$0xf]
        %v546 = vld [vmem:[%s541 + $0x10] sm:$0xf]
        %v547 = vld [vmem:[%s541 + $0x14] sm:$0xf]
        %v548 = vld [vmem:[%s541 + $0x18] sm:$0xf]
        %v549 = vld [vmem:[%s541 + $0x1c] sm:$0xf]
        %v551 = vunpack.c.l.b16 %v540
        %v552 = vpack.c.b16 %v395, %v551
        %vm553 = vcmask 1046528
        %v554 = vrot.slane %v552, 1
        %v555 = vrot.slane %v398, 1
        %v556 = vsel %vm553, %v554, %v555
        %v565 = vunpack.c.l.b16 %v542
        %v566 = vunpack.c.l.b16 %v543
        %v567 = vunpack.c.l.b16 %v544
        %v568 = vunpack.c.l.b16 %v545
        %v569 = vunpack.c.l.b16 %v546
        %v570 = vunpack.c.l.b16 %v547
        %v571 = vunpack.c.l.b16 %v548
        %v572 = vunpack.c.l.b16 %v549
        %v573 = vpack.c.b16 %v566, %v565
        %v574 = vpack.c.b16 %v568, %v567
        %v575 = vpack.c.b16 %v570, %v569
        %v576 = vpack.c.b16 %v572, %v571
        %v582 = vsel %vm452, %v556, 0
        %584 = vmatpush.bf16.msra.mxu0 0
        %585 = vmatpush.bf16.msra.mxu0 0
        %586 = vmatpush.bf16.msra.mxu0 0
        %587 = vmatpush.bf16.msra.mxu0 0
        %588 = vmatpush.bf16.msra.mxu0 %v576
        %589 = vmatpush.bf16.msra.mxu0 %v575
        %590 = vmatpush.bf16.msra.mxu0 %v574
        %591 = vmatpush.bf16.msra.mxu0 %v573
        %592 = vmatmul.bf16.gmra.mxu0 %v582
        %v593 = vpop.f32.mrf.mxu0
        %v594 = vadd.f32 0.0, %v593
        %v595 = vpop.f32.mrf.mxu0
        %v596 = vadd.f32 0.0, %v595
        %597 = vdwg.mxu0
        %v598 = vadd.f32 %v536, %v594
        %v599 = vadd.f32 %v538, %v596
        %v600 = vld [vmem:[%s5 + $0x3] sm:$0x1]
        %v601 = vperm.slane %v600, 0
        %v602 = vadd.f32 %v480, %v601
        %v603 = vadd.f32 %v482, %v601
        %v604 = vld [vmem:[%s5] sm:$0x1]
        %v605 = vperm.slane %v604, 0
        %v606 = vadd.f32 %v598, %v605
        %v607 = vadd.f32 %v599, %v605
        %vm608 = vcmp.ge.f32.partialorder %v606, 0.0
        %vm609 = vcmp.ge.f32.partialorder %v607, 0.0
        %v610 = vmul.f32 %v606, 0.1
        %v611 = vmul.f32 %v607, 0.1
        %v612 = vsel %vm608, %v606, %v610
        %v613 = vsel %vm609, %v607, %v611
        %614 = vst [vmem:[#allocation3] sm:$0x1] 0
        %615 = vst [vmem:[#allocation3 + $0x8] sm:$0x1] 0
        %v616 = vpack.c.bf16 %v612, %v612
        %v617 = vpack.c.bf16 %v613, %v613
        %v619 = vshrl.u32 %v616, 16
        %v621 = vrot.slane %v619, 7
        %v622 = vshll.u32 %v616, 16
        %v624 = vor.u32 %v621, %v622
        %v625 = vrot.slane %v621, 4
        %v627 = vshrl.u32 %v617, 16
        %v629 = vrot.slane %v627, 7
        %v630 = vshll.u32 %v617, 16
        %v632 = vor.u32 %v629, %v630
        %v633 = vsel %vm346, %v625, %v632
        %v634 = vrot.slane %v629, 4
        %vm638 = vcmask 1043456
        %vm639 = vmand %vm638, %vm368
        %v640 = vld [vmem:[#allocation3] sm:$0xf]
        %v641 = vsel %vm639, %v624, %v640
        %642 = vst [vmem:[#allocation3] sm:$0xf] %v641
        %643 = vst [vmem:[#allocation3 + $0x4] sm:$0xf] %v633
        %vm644 = vcmask 1040384
        %vm645 = vmand %vm644, %vm344
        %v646 = vld [vmem:[#allocation3 + $0x8] sm:$0x1]
        %v647 = vsel %vm645, %v634, %v646
        %648 = vst [vmem:[#allocation3 + $0x8] sm:$0x1] %v647
        %v649 = vld [vmem:[#allocation3] sm:$0xf]
        %v650 = vld [vmem:[#allocation3 + $0x4] sm:$0xf]
        %v651 = vld [vmem:[#allocation10] sm:$0xf]
        %v652 = vld [vmem:[#allocation10 + $0x4] sm:$0xf]
        %v653 = vld [vmem:[#allocation10 + $0x8] sm:$0xf]
        %v654 = vld [vmem:[#allocation10 + $0xc] sm:$0xf]
        %v655 = vld [vmem:[#allocation10 + $0x10] sm:$0xf]
        %v656 = vld [vmem:[#allocation10 + $0x14] sm:$0xf]
        %v657 = vld [vmem:[#allocation10 + $0x18] sm:$0xf]
        %v658 = vld [vmem:[#allocation10 + $0x1c] sm:$0xf]
        %v659 = vld [vmem:[#allocation10 + $0x20] sm:$0xf]
        %v660 = vld [vmem:[#allocation10 + $0x24] sm:$0xf]
        %v661 = vld [vmem:[#allocation10 + $0x28] sm:$0xf]
        %v662 = vld [vmem:[#allocation10 + $0x2c] sm:$0xf]
        %v663 = vld [vmem:[#allocation10 + $0x30] sm:$0xf]
        %v664 = vld [vmem:[#allocation10 + $0x34] sm:$0xf]
        %v665 = vld [vmem:[#allocation10 + $0x38] sm:$0xf]
        %v666 = vld [vmem:[#allocation10 + $0x3c] sm:$0xf]
        %v667 = vld [vmem:[#allocation3 + $0x8] sm:$0x1]
        %s668 = scalar_lea.vmem [#allocation10], 64
        %v669 = vld [vmem:[%s668] sm:$0xf]
        %v670 = vld [vmem:[%s668 + $0x4] sm:$0xf]
        %v671 = vld [vmem:[%s668 + $0x8] sm:$0xf]
        %v672 = vld [vmem:[%s668 + $0xc] sm:$0xf]
        %v673 = vld [vmem:[%s668 + $0x10] sm:$0xf]
        %v674 = vld [vmem:[%s668 + $0x14] sm:$0xf]
        %v675 = vld [vmem:[%s668 + $0x18] sm:$0xf]
        %v676 = vld [vmem:[%s668 + $0x1c] sm:$0xf]
        %v677 = vld [vmem:[%s668 + $0x20] sm:$0xf]
        %v678 = vld [vmem:[%s668 + $0x24] sm:$0xf]
        %v679 = vld [vmem:[%s668 + $0x28] sm:$0xf]
        %v680 = vld [vmem:[%s668 + $0x2c] sm:$0xf]
        %v681 = vld [vmem:[%s668 + $0x30] sm:$0xf]
        %v682 = vld [vmem:[%s668 + $0x34] sm:$0xf]
        %v683 = vld [vmem:[%s668 + $0x38] sm:$0xf]
        %v684 = vld [vmem:[%s668 + $0x3c] sm:$0xf]
        %v688 = vunpack.c.l.b16 %v649
        %v689 = vunpack.c.l.b16 %v650
        %v690 = vunpack.c.l.b16 %v667
        %v691 = vpack.c.b16 %v689, %v688
        %v692 = vpack.c.b16 %v690, %v690
        %v694 = vshrl.u32 %v691, 16
        %v696 = vshll.u32 %v691, 16
        %v698 = vrot.slane %v696, 1
        %v699 = vor.u32 %v694, %v698
        %v701 = vshll.u32 %v692, 16
        %v703 = vrot.slane %v701, 1
        %v704 = vsel %vm399, %v699, %v703
        %v722 = vunpack.c.l.b16 %v669
        %v723 = vunpack.c.l.b16 %v670
        %v724 = vunpack.c.l.b16 %v671
        %v725 = vunpack.c.l.b16 %v672
        %v726 = vunpack.c.l.b16 %v673
        %v727 = vunpack.c.l.b16 %v674
        %v728 = vunpack.c.l.b16 %v675
        %v729 = vunpack.c.l.b16 %v676
        %v730 = vunpack.c.l.b16 %v677
        %v731 = vunpack.c.l.b16 %v678
        %v732 = vunpack.c.l.b16 %v679
        %v733 = vunpack.c.l.b16 %v680
        %v734 = vunpack.c.l.b16 %v681
        %v735 = vunpack.c.l.b16 %v682
        %v736 = vunpack.c.l.b16 %v683
        %v737 = vunpack.c.l.b16 %v684
        %v738 = vpack.c.b16 %v723, %v722
        %v739 = vpack.c.b16 %v725, %v724
        %v740 = vpack.c.b16 %v727, %v726
        %v741 = vpack.c.b16 %v729, %v728
        %v742 = vpack.c.b16 %v731, %v730
        %v743 = vpack.c.b16 %v733, %v732
        %v744 = vpack.c.b16 %v735, %v734
        %v745 = vpack.c.b16 %v737, %v736
        %754 = vmatpush.bf16.msra.mxu0 %v745
        %755 = vmatpush.bf16.msra.mxu0 %v744
        %756 = vmatpush.bf16.msra.mxu0 %v743
        %757 = vmatpush.bf16.msra.mxu0 %v742
        %758 = vmatpush.bf16.msra.mxu0 %v741
        %759 = vmatpush.bf16.msra.mxu0 %v740
        %760 = vmatpush.bf16.msra.mxu0 %v739
        %761 = vmatpush.bf16.msra.mxu0 %v738
        %762 = vmatmul.bf16.gmra.mxu0 %v704
        %v763 = vpop.f32.mrf.mxu0
        %v764 = vadd.f32 0.0, %v763
        %v765 = vpop.f32.mrf.mxu0
        %v766 = vadd.f32 0.0, %v765
        %767 = vdwg.mxu0
        %v785 = vunpack.c.l.b16 %v651
        %v786 = vunpack.c.l.b16 %v652
        %v787 = vunpack.c.l.b16 %v653
        %v788 = vunpack.c.l.b16 %v654
        %v789 = vunpack.c.l.b16 %v655
        %v790 = vunpack.c.l.b16 %v656
        %v791 = vunpack.c.l.b16 %v657
        %v792 = vunpack.c.l.b16 %v658
        %v793 = vunpack.c.l.b16 %v659
        %v794 = vunpack.c.l.b16 %v660
        %v795 = vunpack.c.l.b16 %v661
        %v796 = vunpack.c.l.b16 %v662
        %v797 = vunpack.c.l.b16 %v663
        %v798 = vunpack.c.l.b16 %v664
        %v799 = vunpack.c.l.b16 %v665
        %v800 = vunpack.c.l.b16 %v666
        %v801 = vpack.c.b16 %v786, %v785
        %v802 = vpack.c.b16 %v788, %v787
        %v803 = vpack.c.b16 %v790, %v789
        %v804 = vpack.c.b16 %v792, %v791
        %v805 = vpack.c.b16 %v794, %v793
        %v806 = vpack.c.b16 %v796, %v795
        %v807 = vpack.c.b16 %v798, %v797
        %v808 = vpack.c.b16 %v800, %v799
        %817 = vmatpush.bf16.msra.mxu0 %v808
        %818 = vmatpush.bf16.msra.mxu0 %v807
        %819 = vmatpush.bf16.msra.mxu0 %v806
        %820 = vmatpush.bf16.msra.mxu0 %v805
        %821 = vmatpush.bf16.msra.mxu0 %v804
        %822 = vmatpush.bf16.msra.mxu0 %v803
        %823 = vmatpush.bf16.msra.mxu0 %v802
        %824 = vmatpush.bf16.msra.mxu0 %v801
        %825 = vmatmul.bf16.gmra.mxu0 %v691
        %v826 = vpop.f32.mrf.mxu0
        %v827 = vadd.f32 %v764, %v826
        %v828 = vpop.f32.mrf.mxu0
        %v829 = vadd.f32 %v766, %v828
        %830 = vdwg.mxu0
        %v831 = vld [vmem:[#allocation3] sm:$0xe]
        %s832 = scalar_lea.vmem [#allocation10], 128
        %v833 = vld [vmem:[%s832] sm:$0xf]
        %v834 = vld [vmem:[%s832 + $0x4] sm:$0xf]
        %v835 = vld [vmem:[%s832 + $0x8] sm:$0xf]
        %v836 = vld [vmem:[%s832 + $0xc] sm:$0xf]
        %v837 = vld [vmem:[%s832 + $0x10] sm:$0xf]
        %v838 = vld [vmem:[%s832 + $0x14] sm:$0xf]
        %v839 = vld [vmem:[%s832 + $0x18] sm:$0xf]
        %v840 = vld [vmem:[%s832 + $0x1c] sm:$0xf]
        %v841 = vld [vmem:[%s832 + $0x20] sm:$0xf]
        %v842 = vld [vmem:[%s832 + $0x24] sm:$0xf]
        %v843 = vld [vmem:[%s832 + $0x28] sm:$0xf]
        %v844 = vld [vmem:[%s832 + $0x2c] sm:$0xf]
        %v845 = vld [vmem:[%s832 + $0x30] sm:$0xf]
        %v846 = vld [vmem:[%s832 + $0x34] sm:$0xf]
        %v847 = vld [vmem:[%s832 + $0x38] sm:$0xf]
        %v848 = vld [vmem:[%s832 + $0x3c] sm:$0xf]
        %v850 = vunpack.c.l.b16 %v831
        %v851 = vpack.c.b16 %v689, %v850
        %v852 = vrot.slane %v851, 1
        %v853 = vrot.slane %v692, 1
        %v854 = vsel %vm553, %v852, %v853
        %v872 = vunpack.c.l.b16 %v833
        %v873 = vunpack.c.l.b16 %v834
        %v874 = vunpack.c.l.b16 %v835
        %v875 = vunpack.c.l.b16 %v836
        %v876 = vunpack.c.l.b16 %v837
        %v877 = vunpack.c.l.b16 %v838
        %v878 = vunpack.c.l.b16 %v839
        %v879 = vunpack.c.l.b16 %v840
        %v880 = vunpack.c.l.b16 %v841
        %v881 = vunpack.c.l.b16 %v842
        %v882 = vunpack.c.l.b16 %v843
        %v883 = vunpack.c.l.b16 %v844
        %v884 = vunpack.c.l.b16 %v845
        %v885 = vunpack.c.l.b16 %v846
        %v886 = vunpack.c.l.b16 %v847
        %v887 = vunpack.c.l.b16 %v848
        %v888 = vpack.c.b16 %v873, %v872
        %v889 = vpack.c.b16 %v875, %v874
        %v890 = vpack.c.b16 %v877, %v876
        %v891 = vpack.c.b16 %v879, %v878
        %v892 = vpack.c.b16 %v881, %v880
        %v893 = vpack.c.b16 %v883, %v882
        %v894 = vpack.c.b16 %v885, %v884
        %v895 = vpack.c.b16 %v887, %v886
        %904 = vmatpush.bf16.msra.mxu0 %v895
        %905 = vmatpush.bf16.msra.mxu0 %v894
        %906 = vmatpush.bf16.msra.mxu0 %v893
        %907 = vmatpush.bf16.msra.mxu0 %v892
        %908 = vmatpush.bf16.msra.mxu0 %v891
        %909 = vmatpush.bf16.msra.mxu0 %v890
        %910 = vmatpush.bf16.msra.mxu0 %v889
        %911 = vmatpush.bf16.msra.mxu0 %v888
        %912 = vmatmul.bf16.gmra.mxu0 %v854
        %v913 = vpop.f32.mrf.mxu0
        %v914 = vadd.f32 0.0, %v913
        %v915 = vpop.f32.mrf.mxu0
        %v916 = vadd.f32 0.0, %v915
        %917 = vdwg.mxu0
        %v918 = vadd.f32 %v827, %v914
        %v919 = vadd.f32 %v829, %v916
        %v920 = vld [vmem:[%s5 + $0x1] sm:$0x1]
        %v921 = vperm.slane %v920, 0
        %v922 = vadd.f32 %v918, %v921
        %v923 = vadd.f32 %v919, %v921
        %vm924 = vcmp.ge.f32.partialorder %v922, 0.0
        %vm925 = vcmp.ge.f32.partialorder %v923, 0.0
        %v926 = vmul.f32 %v922, 0.1
        %v927 = vmul.f32 %v923, 0.1
        %v928 = vsel %vm924, %v922, %v926
        %v929 = vsel %vm925, %v923, %v927
        %v930 = vpack.c.bf16 %v928, %v928
        %v931 = vpack.c.bf16 %v929, %v929
        %v933 = vshrl.u32 %v930, 16
        %v935 = vrot.slane %v933, 7
        %v936 = vshll.u32 %v930, 16
        %v938 = vor.u32 %v935, %v936
        %v939 = vrot.slane %v935, 4
        %v941 = vshrl.u32 %v931, 16
        %v943 = vrot.slane %v941, 7
        %v944 = vshll.u32 %v931, 16
        %v946 = vor.u32 %v943, %v944
        %v947 = vsel %vm346, %v939, %v946
        %v948 = vrot.slane %v943, 4
        %v952 = vsel %vm639, %v938, %v649
        %953 = vst [vmem:[#allocation3] sm:$0xf] %v952
        %954 = vst [vmem:[#allocation3 + $0x4] sm:$0xf] %v947
        %v955 = vld [vmem:[#allocation3 + $0x8] sm:$0x1]
        %v956 = vsel %vm645, %v948, %v955
        %957 = vst [vmem:[#allocation3 + $0x8] sm:$0x1] %v956
        %v958 = vld [vmem:[#allocation3] sm:$0xf]
        %v959 = vld [vmem:[#allocation3 + $0x4] sm:$0xf]
        %v960 = vld [vmem:[#allocation12] sm:$0xf]
        %v961 = vld [vmem:[#allocation12 + $0x4] sm:$0xf]
        %v962 = vld [vmem:[#allocation12 + $0x8] sm:$0xf]
        %v963 = vld [vmem:[#allocation12 + $0xc] sm:$0xf]
        %v964 = vld [vmem:[#allocation12 + $0x10] sm:$0xf]
        %v965 = vld [vmem:[#allocation12 + $0x14] sm:$0xf]
        %v966 = vld [vmem:[#allocation12 + $0x18] sm:$0xf]
        %v967 = vld [vmem:[#allocation12 + $0x1c] sm:$0xf]
        %v968 = vld [vmem:[#allocation12 + $0x20] sm:$0xf]
        %v969 = vld [vmem:[#allocation12 + $0x24] sm:$0xf]
        %v970 = vld [vmem:[#allocation12 + $0x28] sm:$0xf]
        %v971 = vld [vmem:[#allocation12 + $0x2c] sm:$0xf]
        %v972 = vld [vmem:[#allocation12 + $0x30] sm:$0xf]
        %v973 = vld [vmem:[#allocation12 + $0x34] sm:$0xf]
        %v974 = vld [vmem:[#allocation12 + $0x38] sm:$0xf]
        %v975 = vld [vmem:[#allocation12 + $0x3c] sm:$0xf]
        %v976 = vld [vmem:[#allocation3 + $0x8] sm:$0x1]
        %s977 = scalar_lea.vmem [#allocation12], 64
        %v978 = vld [vmem:[%s977] sm:$0xf]
        %v979 = vld [vmem:[%s977 + $0x4] sm:$0xf]
        %v980 = vld [vmem:[%s977 + $0x8] sm:$0xf]
        %v981 = vld [vmem:[%s977 + $0xc] sm:$0xf]
        %v982 = vld [vmem:[%s977 + $0x10] sm:$0xf]
        %v983 = vld [vmem:[%s977 + $0x14] sm:$0xf]
        %v984 = vld [vmem:[%s977 + $0x18] sm:$0xf]
        %v985 = vld [vmem:[%s977 + $0x1c] sm:$0xf]
        %v986 = vld [vmem:[%s977 + $0x20] sm:$0xf]
        %v987 = vld [vmem:[%s977 + $0x24] sm:$0xf]
        %v988 = vld [vmem:[%s977 + $0x28] sm:$0xf]
        %v989 = vld [vmem:[%s977 + $0x2c] sm:$0xf]
        %v990 = vld [vmem:[%s977 + $0x30] sm:$0xf]
        %v991 = vld [vmem:[%s977 + $0x34] sm:$0xf]
        %v992 = vld [vmem:[%s977 + $0x38] sm:$0xf]
        %v993 = vld [vmem:[%s977 + $0x3c] sm:$0xf]
        %v997 = vunpack.c.l.b16 %v958
        %v998 = vunpack.c.l.b16 %v959
        %v999 = vunpack.c.l.b16 %v976
        %v1000 = vpack.c.b16 %v998, %v997
        %v1001 = vpack.c.b16 %v999, %v999
        %v1003 = vshrl.u32 %v1000, 16
        %v1005 = vshll.u32 %v1000, 16
        %v1007 = vrot.slane %v1005, 1
        %v1008 = vor.u32 %v1003, %v1007
        %v1010 = vshll.u32 %v1001, 16
        %v1012 = vrot.slane %v1010, 1
        %v1013 = vsel %vm399, %v1008, %v1012
        %v1031 = vunpack.c.l.b16 %v978
        %v1032 = vunpack.c.l.b16 %v979
        %v1033 = vunpack.c.l.b16 %v980
        %v1034 = vunpack.c.l.b16 %v981
        %v1035 = vunpack.c.l.b16 %v982
        %v1036 = vunpack.c.l.b16 %v983
        %v1037 = vunpack.c.l.b16 %v984
        %v1038 = vunpack.c.l.b16 %v985
        %v1039 = vunpack.c.l.b16 %v986
        %v1040 = vunpack.c.l.b16 %v987
        %v1041 = vunpack.c.l.b16 %v988
        %v1042 = vunpack.c.l.b16 %v989
        %v1043 = vunpack.c.l.b16 %v990
        %v1044 = vunpack.c.l.b16 %v991
        %v1045 = vunpack.c.l.b16 %v992
        %v1046 = vunpack.c.l.b16 %v993
        %v1047 = vpack.c.b16 %v1032, %v1031
        %v1048 = vpack.c.b16 %v1034, %v1033
        %v1049 = vpack.c.b16 %v1036, %v1035
        %v1050 = vpack.c.b16 %v1038, %v1037
        %v1051 = vpack.c.b16 %v1040, %v1039
        %v1052 = vpack.c.b16 %v1042, %v1041
        %v1053 = vpack.c.b16 %v1044, %v1043
        %v1054 = vpack.c.b16 %v1046, %v1045
        %1063 = vmatpush.bf16.msra.mxu0 %v1054
        %1064 = vmatpush.bf16.msra.mxu0 %v1053
        %1065 = vmatpush.bf16.msra.mxu0 %v1052
        %1066 = vmatpush.bf16.msra.mxu0 %v1051
        %1067 = vmatpush.bf16.msra.mxu0 %v1050
        %1068 = vmatpush.bf16.msra.mxu0 %v1049
        %1069 = vmatpush.bf16.msra.mxu0 %v1048
        %1070 = vmatpush.bf16.msra.mxu0 %v1047
        %1071 = vmatmul.bf16.gmra.mxu0 %v1013
        %v1072 = vpop.f32.mrf.mxu0
        %v1073 = vadd.f32 0.0, %v1072
        %v1074 = vpop.f32.mrf.mxu0
        %v1075 = vadd.f32 0.0, %v1074
        %1076 = vdwg.mxu0
        %v1094 = vunpack.c.l.b16 %v960
        %v1095 = vunpack.c.l.b16 %v961
        %v1096 = vunpack.c.l.b16 %v962
        %v1097 = vunpack.c.l.b16 %v963
        %v1098 = vunpack.c.l.b16 %v964
        %v1099 = vunpack.c.l.b16 %v965
        %v1100 = vunpack.c.l.b16 %v966
        %v1101 = vunpack.c.l.b16 %v967
        %v1102 = vunpack.c.l.b16 %v968
        %v1103 = vunpack.c.l.b16 %v969
        %v1104 = vunpack.c.l.b16 %v970
        %v1105 = vunpack.c.l.b16 %v971
        %v1106 = vunpack.c.l.b16 %v972
        %v1107 = vunpack.c.l.b16 %v973
        %v1108 = vunpack.c.l.b16 %v974
        %v1109 = vunpack.c.l.b16 %v975
        %v1110 = vpack.c.b16 %v1095, %v1094
        %v1111 = vpack.c.b16 %v1097, %v1096
        %v1112 = vpack.c.b16 %v1099, %v1098
        %v1113 = vpack.c.b16 %v1101, %v1100
        %v1114 = vpack.c.b16 %v1103, %v1102
        %v1115 = vpack.c.b16 %v1105, %v1104
        %v1116 = vpack.c.b16 %v1107, %v1106
        %v1117 = vpack.c.b16 %v1109, %v1108
        %1126 = vmatpush.bf16.msra.mxu0 %v1117
        %1127 = vmatpush.bf16.msra.mxu0 %v1116
        %1128 = vmatpush.bf16.msra.mxu0 %v1115
        %1129 = vmatpush.bf16.msra.mxu0 %v1114
        %1130 = vmatpush.bf16.msra.mxu0 %v1113
        %1131 = vmatpush.bf16.msra.mxu0 %v1112
        %1132 = vmatpush.bf16.msra.mxu0 %v1111
        %1133 = vmatpush.bf16.msra.mxu0 %v1110
        %1134 = vmatmul.bf16.gmra.mxu0 %v1000
        %v1135 = vpop.f32.mrf.mxu0
        %v1136 = vadd.f32 %v1073, %v1135
        %v1137 = vpop.f32.mrf.mxu0
        %v1138 = vadd.f32 %v1075, %v1137
        %1139 = vdwg.mxu0
        %v1140 = vld [vmem:[#allocation3] sm:$0xe]
        %s1141 = scalar_lea.vmem [#allocation12], 128
        %v1142 = vld [vmem:[%s1141] sm:$0xf]
        %v1143 = vld [vmem:[%s1141 + $0x4] sm:$0xf]
        %v1144 = vld [vmem:[%s1141 + $0x8] sm:$0xf]
        %v1145 = vld [vmem:[%s1141 + $0xc] sm:$0xf]
        %v1146 = vld [vmem:[%s1141 + $0x10] sm:$0xf]
        %v1147 = vld [vmem:[%s1141 + $0x14] sm:$0xf]
        %v1148 = vld [vmem:[%s1141 + $0x18] sm:$0xf]
        %v1149 = vld [vmem:[%s1141 + $0x1c] sm:$0xf]
        %v1150 = vld [vmem:[%s1141 + $0x20] sm:$0xf]
        %v1151 = vld [vmem:[%s1141 + $0x24] sm:$0xf]
        %v1152 = vld [vmem:[%s1141 + $0x28] sm:$0xf]
        %v1153 = vld [vmem:[%s1141 + $0x2c] sm:$0xf]
        %v1154 = vld [vmem:[%s1141 + $0x30] sm:$0xf]
        %v1155 = vld [vmem:[%s1141 + $0x34] sm:$0xf]
        %v1156 = vld [vmem:[%s1141 + $0x38] sm:$0xf]
        %v1157 = vld [vmem:[%s1141 + $0x3c] sm:$0xf]
        %v1159 = vunpack.c.l.b16 %v1140
        %v1160 = vpack.c.b16 %v998, %v1159
        %v1161 = vrot.slane %v1160, 1
        %v1162 = vrot.slane %v1001, 1
        %v1163 = vsel %vm553, %v1161, %v1162
        %v1181 = vunpack.c.l.b16 %v1142
        %v1182 = vunpack.c.l.b16 %v1143
        %v1183 = vunpack.c.l.b16 %v1144
        %v1184 = vunpack.c.l.b16 %v1145
        %v1185 = vunpack.c.l.b16 %v1146
        %v1186 = vunpack.c.l.b16 %v1147
        %v1187 = vunpack.c.l.b16 %v1148
        %v1188 = vunpack.c.l.b16 %v1149
        %v1189 = vunpack.c.l.b16 %v1150
        %v1190 = vunpack.c.l.b16 %v1151
        %v1191 = vunpack.c.l.b16 %v1152
        %v1192 = vunpack.c.l.b16 %v1153
        %v1193 = vunpack.c.l.b16 %v1154
        %v1194 = vunpack.c.l.b16 %v1155
        %v1195 = vunpack.c.l.b16 %v1156
        %v1196 = vunpack.c.l.b16 %v1157
        %v1197 = vpack.c.b16 %v1182, %v1181
        %v1198 = vpack.c.b16 %v1184, %v1183
        %v1199 = vpack.c.b16 %v1186, %v1185
        %v1200 = vpack.c.b16 %v1188, %v1187
        %v1201 = vpack.c.b16 %v1190, %v1189
        %v1202 = vpack.c.b16 %v1192, %v1191
        %v1203 = vpack.c.b16 %v1194, %v1193
        %v1204 = vpack.c.b16 %v1196, %v1195
        %1213 = vmatpush.bf16.msra.mxu0 %v1204
        %1214 = vmatpush.bf16.msra.mxu0 %v1203
        %1215 = vmatpush.bf16.msra.mxu0 %v1202
        %1216 = vmatpush.bf16.msra.mxu0 %v1201
        %1217 = vmatpush.bf16.msra.mxu0 %v1200
        %1218 = vmatpush.bf16.msra.mxu0 %v1199
        %1219 = vmatpush.bf16.msra.mxu0 %v1198
        %1220 = vmatpush.bf16.msra.mxu0 %v1197
        %1221 = vmatmul.bf16.gmra.mxu0 %v1163
        %v1222 = vpop.f32.mrf.mxu0
        %v1223 = vadd.f32 0.0, %v1222
        %v1224 = vpop.f32.mrf.mxu0
        %v1225 = vadd.f32 0.0, %v1224
        %1226 = vdwg.mxu0
        %v1227 = vadd.f32 %v1136, %v1223
        %v1228 = vadd.f32 %v1138, %v1225
        %v1229 = vld [vmem:[%s5 + $0x2] sm:$0x1]
        %v1230 = vperm.slane %v1229, 0
        %v1231 = vadd.f32 %v1227, %v1230
        %v1232 = vadd.f32 %v1228, %v1230
        %v1233 = vadd.f32 %v1231, %v602
        %v1234 = vadd.f32 %v1232, %v603
        %1235 = vst [vmem:[%s337] sm:$0xff] %v1233
        %1236 = vst [vmem:[%s337 + $0x8] sm:$0xff] %v1234
        %s1237 = sand.u32 %s164, 1
        %s1238 = scalar_lea.sflag [#allocation6], %s1237
        %s1239 = sand.u32 %s164, 1
        %s1240 = smul.addr %s1239, 16
        %s1241 = scalar_lea.vmem [#allocation13], %s1240
        // Predicated region
        $region65: #{tpu_custom_call.1} parent=43 // pred_check
          %p1242 = pneg %p174
        $region66: #{tpu_custom_call.1} parent=43 // pred_check_branch
          %1244 = sbr.rel (%p1242) target = $region68
        $region67: #{tpu_custom_call.1} parent=43 // pred_region
          %1246 = vsyncadd %s1238, 0
          %s1247 = smul.addr %s25, 2
          %s1248 = smul.addr %s1247, 8
          %s1249 = scalar_lea.hbm %s6, %s1248
          %s1250 = sshll.u32 %s1241, 4
          %s1251 = int_to_ptr.vmem [resolvable:$true] %s1250
          %s1252 = sshll.u32 %s1249, 4
          %s1253 = int_to_ptr.hbm [resolvable:$true] %s1252
          %1258 = dma.vmem_to_hbm [thread:$0]  %s1251, 256, %s1253, %s1238, 128, 128, 8
        $region68: #{tpu_custom_call.1} parent=43 // pred_fallthru
          _
      $region44: #{tpu_custom_call.1} parent=5 // pred_fallthru
        _
      %p1259 = scmp.le.s32.totalorder 2, %s20
      // Predicated region
      $region69: #{tpu_custom_call.1} parent=5 // pred_check
        %p1260 = pneg %p1259
      $region70: #{tpu_custom_call.1} parent=5 // pred_check_branch
        %1262 = sbr.rel (%p1260) target = $region72
      $region71: #{tpu_custom_call.1} parent=5 // pred_region
        %s1263 = ssub.s32 %s20, 2
        // Predicated region
        $region73: #{tpu_custom_call.1} parent=71 // pred_check
          %p1264 = pneg %p180
        $region74: #{tpu_custom_call.1} parent=71 // pred_check_branch
          %1266 = sbr.rel (%p1264) target = $region76
        $region75: #{tpu_custom_call.1} parent=71 // pred_region
          %s1267 = sand.u32 %s165, 1
          %s1268 = scalar_lea.sflag [#allocation6], %s1267
          %s1269 = sand.u32 %s165, 1
          %s1270 = smul.addr %s1269, 16
          %s1271 = scalar_lea.vmem [#allocation13], %s1270
          %1273 = dma.done %s1268, 256
        $region76: #{tpu_custom_call.1} parent=71 // pred_fallthru
          _
      $region72: #{tpu_custom_call.1} parent=5 // pred_fallthru
        _
    $region6: #{tpu_custom_call.1} parent=1 // loop_footer
      %s24 = sadd.s32 1, %s20
    $region7: #{tpu_custom_call.1} parent=1 // loop_footer_branch
      %19 = sbr.rel target = $region3
    $region8: #{tpu_custom_call.1} parent=1 // loop_exit
      _
    %1274 = vsyncpa [#allocation5], 1
    %s1275 = scalar_lea.sflag [#allocation5], 1
    %1276 = vsyncpa %s1275, 1
    %1277 = vsyncpa [#allocation8], 1
    %1278 = vsyncpa [#allocation11], 1
    %1279 = vsyncpa [#allocation6], 1
    %s1280 = scalar_lea.sflag [#allocation6], 1
    %1281 = vsyncpa %s1280, 1

</llo_original>
